<compile_context>
chip_gen: v6e
topology: v6e:2x2x1
jax: 0.10.0
libtpu: 0.0.40
codegen_flags: <defaults>
</compile_context>

<pallas_src>
import functools

import jax
import jax.numpy as jnp
from jax import lax
from jax.experimental import pallas as pl
from jax.experimental.pallas import tpu as pltpu

DR_RATE = 0.5     # matches nn.Dropout(p=0.5)
LANE = 128        # lane width; logits padded to a multiple of this
TB_MAX = 128      # max batch rows per grid step (MXU row fill)


def bert_classifier_kernel(
        seed_ref,         # SMEM (1,)        int32   (scalar prefetch)
        token_ids_ref,    # SMEM (B_pad, S)  int32   (scalar prefetch)
        valid_len_s_ref,  # SMEM (B_pad,)    int32   (scalar prefetch)
        segment_ids_ref,  # VMEM (TB, S)     int32
        valid_len_ref,    # VMEM (TB, 1)     int32
        tok_emb_ref,      # VMEM (V, H)      f32
        seg_emb_ref,      # VMEM (2, H)      f32
        pos_emb_ref,      # VMEM (S, H)      bf16
        pooler_w_ref,     # VMEM (H, H)      bf16
        pooler_b_ref,     # VMEM (1, H)      f32
        cls_w_ref,        # VMEM (H, Cp)     bf16
        cls_b_ref,        # VMEM (1, Cp)     f32
        out_ref,          # VMEM (TB, Cp)    f32
        pooled_tok_ref,   # VMEM (TB, H)     f32 scratch
        *, train: bool):
    tb, S = segment_ids_ref.shape
    H = tok_emb_ref.shape[1]
    row0 = pl.program_id(0) * tb          # first global batch row of this tile

    # ---- gen_attention_mask -> mean-pooling weights (vectorized) -----------
    vl = valid_len_ref[...]                                    # (TB,1) int32
    pos_idx = lax.broadcasted_iota(jnp.int32, (tb, S), 1)
    mask = (pos_idx < vl).astype(jnp.float32)                  # (TB,S)
    w = mask / jnp.maximum(vl.astype(jnp.float32), 1.0)        # (TB,S)

    # ---- token-embedding gather fused with pooling --------------------------
    # pooled_tok[b] = sum_s w[b,s] * tok_emb[token_ids[b,s]]
    def row_body(b, carry):
        r = row0 + b
        vl_b = valid_len_s_ref[r]
        inv_b = 1.0 / jnp.maximum(vl_b, 1).astype(jnp.float32)

        def s_body(s, acc):
            tok_id = token_ids_ref[r, s]                        # SMEM scalar
            wgt = jnp.where(s < vl_b, inv_b, 0.0)
            row = tok_emb_ref[pl.ds(tok_id, 1), :]              # (1, H) f32
            return acc + wgt * row

        acc = lax.fori_loop(0, S, s_body, jnp.zeros((1, H), jnp.float32),
                            unroll=8)
        pooled_tok_ref[pl.ds(b, 1), :] = acc                    # 1 store / row
        return carry

    lax.fori_loop(0, tb, row_body, 0)

    # ---- position contribution: one clean (TB,S) x (S,H) MXU matmul --------
    pooled_pos = jnp.dot(w.astype(jnp.bfloat16), pos_emb_ref[...],
                         preferred_element_type=jnp.float32)    # (TB,H)

    # ---- segment contribution in closed form from the 2-row table ----------
    seg1 = (segment_ids_ref[...] > 0).astype(jnp.float32)       # (TB,S)
    sw1 = jnp.sum(w * seg1, axis=1, keepdims=True)              # (TB,1)
    sw0 = jnp.sum(w, axis=1, keepdims=True) - sw1               # (TB,1)
    pooled_seg = sw0 * seg_emb_ref[0:1, :] + sw1 * seg_emb_ref[1:2, :]

    pooled = pooled_tok_ref[...] + pooled_pos + pooled_seg      # (TB,H) f32

    # ---- synthetic BERT pooler: dense + tanh (bf16 MXU, f32 accumulate) ----
    pooler = jnp.tanh(
        jnp.dot(pooled.astype(jnp.bfloat16), pooler_w_ref[...],
                preferred_element_type=jnp.float32) + pooler_b_ref[...])

    # ---- dropout (inverted, p = DR_RATE); identity when not training -------
    if train:
        scale = 1.0 / (1.0 - DR_RATE)
        thresh = jnp.uint32(int(DR_RATE * 4294967296.0))         # P(keep)=1-p
        rows = (lax.broadcasted_iota(jnp.int32, (tb, H), 0) + row0
                ).astype(jnp.uint32)
        cols = lax.broadcasted_iota(jnp.int32, (tb, H), 1).astype(jnp.uint32)
        seed = seed_ref[0].astype(jnp.uint32)
        x = (rows * jnp.uint32(0x9E3779B1) + cols * jnp.uint32(0x85EBCA77)
             + seed * jnp.uint32(0x27D4EB2F))
        x = (x ^ (x >> 16)) * jnp.uint32(0x7FEB352D)
        x = x ^ (x >> 15)
        act = jnp.where(x >= thresh, pooler * scale, 0.0)
    else:
        act = pooler

    # ---- classifier: Linear(hidden -> num_classes), lane-dense output ------
    out_ref[...] = (
        jnp.dot(act.astype(jnp.bfloat16), cls_w_ref[...],
                preferred_element_type=jnp.float32) + cls_b_ref[...])


def bert_classifier(seed, token_ids, segment_ids, valid_length,
                    tok_emb, seg_emb, pos_emb,
                    pooler_w, pooler_b, cls_w, cls_b, *, train=True):
    B, S = token_ids.shape
    V, H = tok_emb.shape
    C = cls_w.shape[1]

    # Batch tile: as many sublane-aligned rows as the batch allows (cap 128 so
    # the pooler/classifier GEMMs fill the MXU rows); large batches keep >= 2
    # grid steps so ("parallel",) can shard across v7x's two TensorCores.
    TB = int(min(TB_MAX, pl.cdiv(B, 8) * 8))
    B_pad = int(pl.cdiv(B, TB)) * TB
    C_pad = int(pl.cdiv(C, LANE)) * LANE
    grid = (B_pad // TB,)

    # Pad batch (padded rows get valid_length = 0 -> zero pooling weights) and
    # classes (lane-dense, unmasked output stores; sliced off below).
    tok_p = jnp.zeros((B_pad, S), jnp.int32).at[:B].set(token_ids.astype(jnp.int32))
    seg_p = jnp.zeros((B_pad, S), jnp.int32).at[:B].set(segment_ids.astype(jnp.int32))
    vl_flat = jnp.zeros((B_pad,), jnp.int32).at[:B].set(
        valid_length.reshape(B).astype(jnp.int32))
    vl_col = vl_flat.reshape(B_pad, 1)
    cls_w_p = jnp.zeros((H, C_pad), jnp.float32).at[:, :C].set(cls_w.astype(jnp.float32))
    cls_b_p = jnp.zeros((1, C_pad), jnp.float32).at[:, :C].set(
        cls_b.reshape(1, C).astype(jnp.float32))

    # bf16 weights for the MXU matmuls (f32 accumulation in-kernel).
    tok_emb_f = tok_emb.astype(jnp.float32)      # f32: dynamic row gather
    seg_emb_f = seg_emb.astype(jnp.float32)
    pos_emb_bf = pos_emb.astype(jnp.bfloat16)
    pooler_w_bf = pooler_w.astype(jnp.bfloat16)
    pooler_b_f = pooler_b.reshape(1, H).astype(jnp.float32)
    cls_w_bf = cls_w_p.astype(jnp.bfloat16)

    def _nbytes(a):
        return int(a.size) * a.dtype.itemsize

    # Grid-invariant operands and per-step blocks are double-buffered by the
    # pipeline (x2); the pooled-token scratch is single.
    resident = sum(_nbytes(a) for a in
                   (tok_emb_f, seg_emb_f, pos_emb_bf, pooler_w_bf,
                    pooler_b_f, cls_w_bf, cls_b_p))
    per_step = (TB * S * 4) + (TB * 4) + (TB * C_pad * 4)
    needed = 2 * (resident + per_step) + TB * H * 4
    try:
        phys_vmem = int(pltpu.get_tpu_info().vmem_capacity_bytes)
    except Exception:
        phys_vmem = 64 << 20                 # v7x per-core size: safe floor
    vmem_cap = (phys_vmem * 3) // 4          # headroom for compiler scratch
    vmem_limit = int(min(max(needed + (16 << 20), 32 << 20), vmem_cap))

    grid_spec = pltpu.PrefetchScalarGridSpec(
        num_scalar_prefetch=3,               # seed, token ids, valid lengths
        grid=grid,
        in_specs=[
            pl.BlockSpec((TB, S), lambda i, *_: (i, 0)),        # segment_ids
            pl.BlockSpec((TB, 1), lambda i, *_: (i, 0)),        # valid_length
            pl.BlockSpec((V, H), lambda i, *_: (0, 0)),         # tok_emb
            pl.BlockSpec((2, H), lambda i, *_: (0, 0)),         # seg_emb
            pl.BlockSpec((S, H), lambda i, *_: (0, 0)),         # pos_emb
            pl.BlockSpec((H, H), lambda i, *_: (0, 0)),         # pooler_w
            pl.BlockSpec((1, H), lambda i, *_: (0, 0)),         # pooler_b
            pl.BlockSpec((H, C_pad), lambda i, *_: (0, 0)),     # cls_w
            pl.BlockSpec((1, C_pad), lambda i, *_: (0, 0)),     # cls_b
        ],
        out_specs=pl.BlockSpec((TB, C_pad), lambda i, *_: (i, 0)),
        scratch_shapes=[pltpu.VMEM((TB, H), jnp.float32)],
    )

    out = pl.pallas_call(
        functools.partial(bert_classifier_kernel, train=train),
        out_shape=jax.ShapeDtypeStruct((B_pad, C_pad), jnp.float32),
        grid_spec=grid_spec,
        compiler_params=pltpu.CompilerParams(
            dimension_semantics=("parallel",),
            vmem_limit_bytes=vmem_limit),
    )(seed.reshape(1).astype(jnp.int32), tok_p, vl_flat,
      seg_p, vl_col,
      tok_emb_f, seg_emb_f, pos_emb_bf,
      pooler_w_bf, pooler_b_f, cls_w_bf, cls_b_p)

    return out[:B, :C]


def _reference_eval(token_ids, segment_ids, valid_length,
                    tok_emb, seg_emb, pos_emb, pooler_w, pooler_b, cls_w, cls_b):
    """Pure-JAX f32 forward (eval mode, no dropout) for a sanity check."""
    B, S = token_ids.shape
    emb = tok_emb[token_ids] + seg_emb[segment_ids] + pos_emb[None]
    mask = (jnp.arange(S)[None, :] < valid_length.reshape(B, 1)).astype(jnp.float32)
    w = mask / jnp.maximum(mask.sum(axis=1, keepdims=True), 1.0)
    pooled = jnp.einsum('bs,bsh->bh', w, emb)
    pooler = jnp.tanh(pooled @ pooler_w + pooler_b.reshape(1, -1))
    return pooler @ cls_w + cls_b.reshape(1, -1)


if __name__ == "__main__":
    # Small shapes consistent with the forward: batch=2, seq=8, hidden=128
    # (lane-aligned), vocab=64, num_classes=16 (scaled down from 768 / 447).
    B, S, V, H, C = 2, 8, 64, 128, 16

    key = jax.random.PRNGKey(0)
    k_tok, k_te, k_se, k_pe, k_pw, k_cw = jax.random.split(key, 6)

    token_ids = jax.random.randint(k_tok, (B, S), 0, V, dtype=jnp.int32)
    segment_ids = jnp.concatenate(
        [jnp.zeros((B, S // 2), jnp.int32), jnp.ones((B, S // 2), jnp.int32)], axis=1)
    valid_length = jnp.array([5, 8], dtype=jnp.int32)

    tok_emb = 0.02 * jax.random.normal(k_te, (V, H), jnp.float32)
    seg_emb = 0.02 * jax.random.normal(k_se, (2, H), jnp.float32)
    pos_emb = 0.02 * jax.random.normal(k_pe, (S, H), jnp.float32)
    pooler_w = jax.random.normal(k_pw, (H, H), jnp.float32) / jnp.sqrt(1.0 * H)
    pooler_b = jnp.zeros((1, H), jnp.float32)
    cls_w = jax.random.normal(k_cw, (H, C), jnp.float32) / jnp.sqrt(1.0 * H)
    cls_b = jnp.zeros((1, C), jnp.float32)

    seed = jnp.array([0], dtype=jnp.int32)   # deterministic dropout stream

    # Training path (dropout active, as in the PyTorch module's train mode).
    logits_train = bert_classifier(seed, token_ids, segment_ids, valid_length,
                                   tok_emb, seg_emb, pos_emb,
                                   pooler_w, pooler_b, cls_w, cls_b, train=True)
    jax.block_until_ready(logits_train)
    assert logits_train.shape == (B, C)
    assert bool(jnp.all(jnp.isfinite(logits_train)))

    # Eval path vs. pure-JAX f32 reference (loose tolerance for bf16 GEMMs).
    logits_eval = bert_classifier(seed, token_ids, segment_ids, valid_length,
                                  tok_emb, seg_emb, pos_emb,
                                  pooler_w, pooler_b, cls_w, cls_b, train=False)
    ref = _reference_eval(token_ids, segment_ids, valid_length,
                          tok_emb, seg_emb, pos_emb,
                          pooler_w, pooler_b, cls_w, cls_b)
    jax.block_until_ready(logits_eval)
    assert logits_eval.shape == (B, C)
    assert bool(jnp.allclose(logits_eval, ref, atol=3e-2, rtol=3e-2))

    print("KERNEL_OK")
</pallas_src>

<mosaic_0001>
module attributes {stable_mosaic.version = 11 : i64} {
  func.func @bert_classifier_kernel(%arg0: i32, %arg1: memref<1xi32, #tpu.memory_space<smem>>, %arg2: memref<8x8xi32, #tpu.memory_space<smem>>, %arg3: memref<8xi32, #tpu.memory_space<smem>>, %arg4: memref<8x8xi32, #tpu.memory_space<vmem>>, %arg5: memref<8x1xi32, #tpu.memory_space<vmem>>, %arg6: memref<64x128xf32, #tpu.memory_space<vmem>>, %arg7: memref<2x128xf32, #tpu.memory_space<vmem>>, %arg8: memref<8x128xbf16, #tpu.memory_space<vmem>>, %arg9: memref<128x128xbf16, #tpu.memory_space<vmem>>, %arg10: memref<1x128xf32, #tpu.memory_space<vmem>>, %arg11: memref<128x128xbf16, #tpu.memory_space<vmem>>, %arg12: memref<1x128xf32, #tpu.memory_space<vmem>>, %arg13: memref<8x128xf32, #tpu.memory_space<vmem>>, %arg14: memref<8x128xf32, #tpu.memory_space<vmem>>) attributes {dimension_semantics = [#tpu.dimension_semantics<parallel>], iteration_bounds = array<i64: 1>, scalar_prefetch = 3 : i64, scratch_operands = 1 : i64, tpu.core_type = #tpu.core_type<tc>, window_params = [{transform_indices = @transform_0, window_bounds = array<i64: 8, 8>}, {transform_indices = @transform_1, window_bounds = array<i64: 8, 1>}, {pipeline_mode = #tpu.pipeline_mode<synchronous>, transform_indices = @transform_2, window_bounds = array<i64: 64, 128>}, {pipeline_mode = #tpu.pipeline_mode<synchronous>, transform_indices = @transform_3, window_bounds = array<i64: 2, 128>}, {pipeline_mode = #tpu.pipeline_mode<synchronous>, transform_indices = @transform_4, window_bounds = array<i64: 8, 128>}, {pipeline_mode = #tpu.pipeline_mode<synchronous>, transform_indices = @transform_5, window_bounds = array<i64: 128, 128>}, {pipeline_mode = #tpu.pipeline_mode<synchronous>, transform_indices = @transform_6, window_bounds = array<i64: 1, 128>}, {pipeline_mode = #tpu.pipeline_mode<synchronous>, transform_indices = @transform_7, window_bounds = array<i64: 128, 128>}, {pipeline_mode = #tpu.pipeline_mode<synchronous>, transform_indices = @transform_8, window_bounds = array<i64: 1, 128>}, {transform_indices = @transform_9, window_bounds = array<i64: 8, 128>}]} {
    %c8_i32 = arith.constant 8 : i32
    %0 = arith.muli %arg0, %c8_i32 : i32
    %c0 = arith.constant 0 : index
    %c0_0 = arith.constant 0 : index
    %1 = vector.load %arg5[%c0, %c0_0] : memref<8x1xi32, #tpu.memory_space<vmem>>, vector<8x1xi32>
    %2 = tpu.iota {dimensions = array<i32: 1>} : vector<8x8xi32>
    %3 = vector.broadcast %1 : vector<8x1xi32> to vector<8x8xi32>
    %4 = arith.cmpi slt, %2, %3 : vector<8x8xi32>
    %5 = arith.extui %4 : vector<8x8xi1> to vector<8x8xi32>
    %6 = arith.sitofp %5 : vector<8x8xi32> to vector<8x8xf32>
    %7 = arith.sitofp %1 : vector<8x1xi32> to vector<8x1xf32>
    %cst = arith.constant 1.000000e+00 : f32
    %8 = vector.broadcast %cst : f32 to vector<8x1xf32>
    %9 = arith.maximumf %7, %8 : vector<8x1xf32>
    %10 = vector.broadcast %9 : vector<8x1xf32> to vector<8x8xf32>
    %11 = arith.divf %6, %10 : vector<8x8xf32>
    %c0_i32 = arith.constant 0 : i32
    %c8_i32_1 = arith.constant 8 : i32
    %12 = arith.addi %c0_i32, %c8_i32_1 : i32
    %c1_i32 = arith.constant 1 : i32
    scf.for %arg15 = %c0_i32 to %12 step %c1_i32  : i32 {
      %80 = arith.addi %0, %arg15 : i32
      %81 = arith.index_cast %80 : i32 to index
      %82 = memref.load %arg3[%81] : memref<8xi32, #tpu.memory_space<smem>>
      %c1_i32_31 = arith.constant 1 : i32
      %83 = arith.maxsi %82, %c1_i32_31 : i32
      %84 = arith.sitofp %83 : i32 to f32
      %cst_32 = arith.constant 1.000000e+00 : f32
      %85 = arith.divf %cst_32, %84 : f32
      %cst_33 = arith.constant 0.000000e+00 : f32
      %86 = vector.broadcast %cst_33 : f32 to vector<1x128xf32>
      %c0_i32_34 = arith.constant 0 : i32
      %87 = arith.index_cast %80 : i32 to index
      %88 = arith.index_cast %c0_i32_34 : i32 to index
      %89 = memref.load %arg2[%87, %88] : memref<8x8xi32, #tpu.memory_space<smem>>
      %90 = arith.cmpi slt, %c0_i32_34, %82 : i32
      %cst_35 = arith.constant 0.000000e+00 : f32
      %91 = arith.select %90, %85, %cst_35 : f32
      %92 = arith.index_cast %89 : i32 to index
      %c0_36 = arith.constant 0 : index
      %93 = vector.load %arg6[%92, %c0_36] : memref<64x128xf32, #tpu.memory_space<vmem>>, vector<1x128xf32>
      %94 = vector.broadcast %91 : f32 to vector<1x128xf32>
      %95 = arith.mulf %94, %93 : vector<1x128xf32>
      %96 = arith.addf %86, %95 : vector<1x128xf32>
      %c1_i32_37 = arith.constant 1 : i32
      %97 = arith.index_cast %80 : i32 to index
      %98 = arith.index_cast %c1_i32_37 : i32 to index
      %99 = memref.load %arg2[%97, %98] : memref<8x8xi32, #tpu.memory_space<smem>>
      %100 = arith.cmpi slt, %c1_i32_37, %82 : i32
      %cst_38 = arith.constant 0.000000e+00 : f32
      %101 = arith.select %100, %85, %cst_38 : f32
      %102 = arith.index_cast %99 : i32 to index
      %c0_39 = arith.constant 0 : index
      %103 = vector.load %arg6[%102, %c0_39] : memref<64x128xf32, #tpu.memory_space<vmem>>, vector<1x128xf32>
      %104 = vector.broadcast %101 : f32 to vector<1x128xf32>
      %105 = arith.mulf %104, %103 : vector<1x128xf32>
      %106 = arith.addf %96, %105 : vector<1x128xf32>
      %c2_i32 = arith.constant 2 : i32
      %107 = arith.index_cast %80 : i32 to index
      %108 = arith.index_cast %c2_i32 : i32 to index
      %109 = memref.load %arg2[%107, %108] : memref<8x8xi32, #tpu.memory_space<smem>>
      %110 = arith.cmpi slt, %c2_i32, %82 : i32
      %cst_40 = arith.constant 0.000000e+00 : f32
      %111 = arith.select %110, %85, %cst_40 : f32
      %112 = arith.index_cast %109 : i32 to index
      %c0_41 = arith.constant 0 : index
      %113 = vector.load %arg6[%112, %c0_41] : memref<64x128xf32, #tpu.memory_space<vmem>>, vector<1x128xf32>
      %114 = vector.broadcast %111 : f32 to vector<1x128xf32>
      %115 = arith.mulf %114, %113 : vector<1x128xf32>
      %116 = arith.addf %106, %115 : vector<1x128xf32>
      %c3_i32 = arith.constant 3 : i32
      %117 = arith.index_cast %80 : i32 to index
      %118 = arith.index_cast %c3_i32 : i32 to index
      %119 = memref.load %arg2[%117, %118] : memref<8x8xi32, #tpu.memory_space<smem>>
      %120 = arith.cmpi slt, %c3_i32, %82 : i32
      %cst_42 = arith.constant 0.000000e+00 : f32
      %121 = arith.select %120, %85, %cst_42 : f32
      %122 = arith.index_cast %119 : i32 to index
      %c0_43 = arith.constant 0 : index
      %123 = vector.load %arg6[%122, %c0_43] : memref<64x128xf32, #tpu.memory_space<vmem>>, vector<1x128xf32>
      %124 = vector.broadcast %121 : f32 to vector<1x128xf32>
      %125 = arith.mulf %124, %123 : vector<1x128xf32>
      %126 = arith.addf %116, %125 : vector<1x128xf32>
      %c4_i32 = arith.constant 4 : i32
      %127 = arith.index_cast %80 : i32 to index
      %128 = arith.index_cast %c4_i32 : i32 to index
      %129 = memref.load %arg2[%127, %128] : memref<8x8xi32, #tpu.memory_space<smem>>
      %130 = arith.cmpi slt, %c4_i32, %82 : i32
      %cst_44 = arith.constant 0.000000e+00 : f32
      %131 = arith.select %130, %85, %cst_44 : f32
      %132 = arith.index_cast %129 : i32 to index
      %c0_45 = arith.constant 0 : index
      %133 = vector.load %arg6[%132, %c0_45] : memref<64x128xf32, #tpu.memory_space<vmem>>, vector<1x128xf32>
      %134 = vector.broadcast %131 : f32 to vector<1x128xf32>
      %135 = arith.mulf %134, %133 : vector<1x128xf32>
      %136 = arith.addf %126, %135 : vector<1x128xf32>
      %c5_i32 = arith.constant 5 : i32
      %137 = arith.index_cast %80 : i32 to index
      %138 = arith.index_cast %c5_i32 : i32 to index
      %139 = memref.load %arg2[%137, %138] : memref<8x8xi32, #tpu.memory_space<smem>>
      %140 = arith.cmpi slt, %c5_i32, %82 : i32
      %cst_46 = arith.constant 0.000000e+00 : f32
      %141 = arith.select %140, %85, %cst_46 : f32
      %142 = arith.index_cast %139 : i32 to index
      %c0_47 = arith.constant 0 : index
      %143 = vector.load %arg6[%142, %c0_47] : memref<64x128xf32, #tpu.memory_space<vmem>>, vector<1x128xf32>
      %144 = vector.broadcast %141 : f32 to vector<1x128xf32>
      %145 = arith.mulf %144, %143 : vector<1x128xf32>
      %146 = arith.addf %136, %145 : vector<1x128xf32>
      %c6_i32 = arith.constant 6 : i32
      %147 = arith.index_cast %80 : i32 to index
      %148 = arith.index_cast %c6_i32 : i32 to index
      %149 = memref.load %arg2[%147, %148] : memref<8x8xi32, #tpu.memory_space<smem>>
      %150 = arith.cmpi slt, %c6_i32, %82 : i32
      %cst_48 = arith.constant 0.000000e+00 : f32
      %151 = arith.select %150, %85, %cst_48 : f32
      %152 = arith.index_cast %149 : i32 to index
      %c0_49 = arith.constant 0 : index
      %153 = vector.load %arg6[%152, %c0_49] : memref<64x128xf32, #tpu.memory_space<vmem>>, vector<1x128xf32>
      %154 = vector.broadcast %151 : f32 to vector<1x128xf32>
      %155 = arith.mulf %154, %153 : vector<1x128xf32>
      %156 = arith.addf %146, %155 : vector<1x128xf32>
      %c7_i32 = arith.constant 7 : i32
      %157 = arith.index_cast %80 : i32 to index
      %158 = arith.index_cast %c7_i32 : i32 to index
      %159 = memref.load %arg2[%157, %158] : memref<8x8xi32, #tpu.memory_space<smem>>
      %160 = arith.cmpi slt, %c7_i32, %82 : i32
      %cst_50 = arith.constant 0.000000e+00 : f32
      %161 = arith.select %160, %85, %cst_50 : f32
      %162 = arith.index_cast %159 : i32 to index
      %c0_51 = arith.constant 0 : index
      %163 = vector.load %arg6[%162, %c0_51] : memref<64x128xf32, #tpu.memory_space<vmem>>, vector<1x128xf32>
      %164 = vector.broadcast %161 : f32 to vector<1x128xf32>
      %165 = arith.mulf %164, %163 : vector<1x128xf32>
      %166 = arith.addf %156, %165 : vector<1x128xf32>
      %c8_i32_52 = arith.constant 8 : i32
      %167 = arith.index_cast %arg15 : i32 to index
      %c0_53 = arith.constant 0 : index
      %168 = vector.load %arg14[%167, %c0_53] : memref<8x128xf32, #tpu.memory_space<vmem>>, vector<1x128xf32>
      tpu.vector_store %arg14[%167, %c0_53], %166 {strides = array<i32>} : memref<8x128xf32, #tpu.memory_space<vmem>>, vector<1x128xf32>,
    }
    %c8_i32_2 = arith.constant 8 : i32
    %13 = arith.truncf %11 : vector<8x8xf32> to vector<8x8xbf16>
    %c0_3 = arith.constant 0 : index
    %c0_4 = arith.constant 0 : index
    %14 = vector.load %arg8[%c0_3, %c0_4] : memref<8x128xbf16, #tpu.memory_space<vmem>>, vector<8x128xbf16>
    %cst_5 = arith.constant dense<0.000000e+00> : vector<8x128xf32>
    %15 = tpu.matmul %13, %14, %cst_5 {dimension_numbers = #tpu.dot_dimension_numbers<[1], [0], [0], [1], [0, 0, 1, 1], [], []>} : vector<8x8xbf16>, vector<8x128xbf16>, vector<8x128xf32> -> vector<8x128xf32>
    %c0_6 = arith.constant 0 : index
    %c0_7 = arith.constant 0 : index
    %16 = vector.load %arg4[%c0_6, %c0_7] : memref<8x8xi32, #tpu.memory_space<vmem>>, vector<8x8xi32>
    %c0_i32_8 = arith.constant 0 : i32
    %17 = vector.broadcast %c0_i32_8 : i32 to vector<8x8xi32>
    %18 = arith.cmpi sgt, %16, %17 : vector<8x8xi32>
    %19 = arith.extui %18 : vector<8x8xi1> to vector<8x8xi32>
    %20 = arith.sitofp %19 : vector<8x8xi32> to vector<8x8xf32>
    %21 = arith.mulf %11, %20 : vector<8x8xf32>
    %cst_9 = arith.constant dense<0.000000e+00> : vector<8xf32>
    %22 = vector.multi_reduction <add>, %21, %cst_9 [1] : vector<8x8xf32> to vector<8xf32>
    %23 = vector.shape_cast %22 : vector<8xf32> to vector<8x1xf32>
    %cst_10 = arith.constant dense<0.000000e+00> : vector<8xf32>
    %24 = vector.multi_reduction <add>, %11, %cst_10 [1] : vector<8x8xf32> to vector<8xf32>
    %25 = vector.shape_cast %24 : vector<8xf32> to vector<8x1xf32>
    %26 = arith.subf %25, %23 : vector<8x1xf32>
    %c0_11 = arith.constant 0 : index
    %c0_12 = arith.constant 0 : index
    %27 = vector.load %arg7[%c0_11, %c0_12] : memref<2x128xf32, #tpu.memory_space<vmem>>, vector<1x128xf32>
    %28 = vector.broadcast %26 : vector<8x1xf32> to vector<8x128xf32>
    %29 = vector.broadcast %27 : vector<1x128xf32> to vector<8x128xf32>
    %30 = arith.mulf %28, %29 : vector<8x128xf32>
    %c1 = arith.constant 1 : index
    %c0_13 = arith.constant 0 : index
    %31 = vector.load %arg7[%c1, %c0_13] : memref<2x128xf32, #tpu.memory_space<vmem>>, vector<1x128xf32>
    %32 = vector.broadcast %23 : vector<8x1xf32> to vector<8x128xf32>
    %33 = vector.broadcast %31 : vector<1x128xf32> to vector<8x128xf32>
    %34 = arith.mulf %32, %33 : vector<8x128xf32>
    %35 = arith.addf %30, %34 : vector<8x128xf32>
    %c0_14 = arith.constant 0 : index
    %c0_15 = arith.constant 0 : index
    %36 = vector.load %arg14[%c0_14, %c0_15] : memref<8x128xf32, #tpu.memory_space<vmem>>, vector<8x128xf32>
    %37 = arith.addf %36, %15 : vector<8x128xf32>
    %38 = arith.addf %37, %35 : vector<8x128xf32>
    %39 = arith.truncf %38 : vector<8x128xf32> to vector<8x128xbf16>
    %c0_16 = arith.constant 0 : index
    %c0_17 = arith.constant 0 : index
    %40 = vector.load %arg9[%c0_16, %c0_17] : memref<128x128xbf16, #tpu.memory_space<vmem>>, vector<128x128xbf16>
    %cst_18 = arith.constant dense<0.000000e+00> : vector<8x128xf32>
    %41 = tpu.matmul %39, %40, %cst_18 {dimension_numbers = #tpu.dot_dimension_numbers<[1], [0], [0], [1], [0, 0, 1, 1], [], []>} : vector<8x128xbf16>, vector<128x128xbf16>, vector<8x128xf32> -> vector<8x128xf32>
    %c0_19 = arith.constant 0 : index
    %c0_20 = arith.constant 0 : index
    %42 = vector.load %arg10[%c0_19, %c0_20] : memref<1x128xf32, #tpu.memory_space<vmem>>, vector<1x128xf32>
    %43 = vector.broadcast %42 : vector<1x128xf32> to vector<8x128xf32>
    %44 = arith.addf %41, %43 : vector<8x128xf32>
    %45 = math.tanh %44 : vector<8x128xf32>
    %46 = tpu.iota {dimensions = array<i32: 0>} : vector<8x128xi32>
    %47 = vector.broadcast %0 : i32 to vector<8x128xi32>
    %48 = arith.addi %46, %47 : vector<8x128xi32>
    %49 = tpu.iota {dimensions = array<i32: 1>} : vector<8x128xi32>
    %c0_21 = arith.constant 0 : index
    %50 = memref.load %arg1[%c0_21] : memref<1xi32, #tpu.memory_space<smem>>
    %c-1640531535_i32 = arith.constant -1640531535 : i32
    %51 = vector.broadcast %c-1640531535_i32 : i32 to vector<8x128xi32>
    %52 = arith.muli %48, %51 : vector<8x128xi32>
    %c-2048144777_i32 = arith.constant -2048144777 : i32
    %53 = vector.broadcast %c-2048144777_i32 : i32 to vector<8x128xi32>
    %54 = arith.muli %49, %53 : vector<8x128xi32>
    %55 = arith.addi %52, %54 : vector<8x128xi32>
    %c668265263_i32 = arith.constant 668265263 : i32
    %56 = arith.muli %50, %c668265263_i32 : i32
    %57 = vector.broadcast %56 : i32 to vector<8x128xi32>
    %58 = arith.addi %55, %57 : vector<8x128xi32>
    %c16_i32 = arith.constant 16 : i32
    %59 = vector.broadcast %c16_i32 : i32 to vector<8x128xi32>
    %60 = arith.shrui %58, %59 : vector<8x128xi32>
    %61 = arith.xori %58, %60 : vector<8x128xi32>
    %c2146121005_i32 = arith.constant 2146121005 : i32
    %62 = vector.broadcast %c2146121005_i32 : i32 to vector<8x128xi32>
    %63 = arith.muli %61, %62 : vector<8x128xi32>
    %c15_i32 = arith.constant 15 : i32
    %64 = vector.broadcast %c15_i32 : i32 to vector<8x128xi32>
    %65 = arith.shrui %63, %64 : vector<8x128xi32>
    %66 = arith.xori %63, %65 : vector<8x128xi32>
    %c-2147483648_i32 = arith.constant -2147483648 : i32
    %67 = vector.broadcast %c-2147483648_i32 : i32 to vector<8x128xi32>
    %68 = arith.cmpi uge, %66, %67 : vector<8x128xi32>
    %cst_22 = arith.constant 2.000000e+00 : f32
    %69 = vector.broadcast %cst_22 : f32 to vector<8x128xf32>
    %70 = arith.mulf %45, %69 : vector<8x128xf32>
    %cst_23 = arith.constant 0.000000e+00 : f32
    %71 = vector.broadcast %cst_23 : f32 to vector<8x128xf32>
    %72 = arith.select %68, %70, %71 : vector<8x128xi1>, vector<8x128xf32>
    %73 = arith.truncf %72 : vector<8x128xf32> to vector<8x128xbf16>
    %c0_24 = arith.constant 0 : index
    %c0_25 = arith.constant 0 : index
    %74 = vector.load %arg11[%c0_24, %c0_25] : memref<128x128xbf16, #tpu.memory_space<vmem>>, vector<128x128xbf16>
    %cst_26 = arith.constant dense<0.000000e+00> : vector<8x128xf32>
    %75 = tpu.matmul %73, %74, %cst_26 {dimension_numbers = #tpu.dot_dimension_numbers<[1], [0], [0], [1], [0, 0, 1, 1], [], []>} : vector<8x128xbf16>, vector<128x128xbf16>, vector<8x128xf32> -> vector<8x128xf32>
    %c0_27 = arith.constant 0 : index
    %c0_28 = arith.constant 0 : index
    %76 = vector.load %arg12[%c0_27, %c0_28] : memref<1x128xf32, #tpu.memory_space<vmem>>, vector<1x128xf32>
    %77 = vector.broadcast %76 : vector<1x128xf32> to vector<8x128xf32>
    %78 = arith.addf %75, %77 : vector<8x128xf32>
    %c0_29 = arith.constant 0 : index
    %c0_30 = arith.constant 0 : index
    %79 = vector.load %arg13[%c0_29, %c0_30] : memref<8x128xf32, #tpu.memory_space<vmem>>, vector<8x128xf32>
    tpu.vector_store %arg13[%c0_29, %c0_30], %78 {strides = array<i32>} : memref<8x128xf32, #tpu.memory_space<vmem>>, vector<8x128xf32>,
    return
  }
  func.func @transform_0(%arg0: i32, %arg1: memref<1xi32, #tpu.memory_space<smem>>, %arg2: memref<8x8xi32, #tpu.memory_space<smem>>, %arg3: memref<8xi32, #tpu.memory_space<smem>>) -> (i32, i32) {
    %c0_i32 = arith.constant 0 : i32
    %c0_i32_0 = arith.constant 0 : i32
    return %arg0, %c0_i32 : i32, i32
  }
  func.func @transform_1(%arg0: i32, %arg1: memref<1xi32, #tpu.memory_space<smem>>, %arg2: memref<8x8xi32, #tpu.memory_space<smem>>, %arg3: memref<8xi32, #tpu.memory_space<smem>>) -> (i32, i32) {
    %c0_i32 = arith.constant 0 : i32
    %c0_i32_0 = arith.constant 0 : i32
    return %arg0, %c0_i32 : i32, i32
  }
  func.func @transform_2(%arg0: i32, %arg1: memref<1xi32, #tpu.memory_space<smem>>, %arg2: memref<8x8xi32, #tpu.memory_space<smem>>, %arg3: memref<8xi32, #tpu.memory_space<smem>>) -> (i32, i32) {
    %c0_i32 = arith.constant 0 : i32
    %c0_i32_0 = arith.constant 0 : i32
    %c0_i32_1 = arith.constant 0 : i32
    return %c0_i32, %c0_i32_0 : i32, i32
  }
  func.func @transform_3(%arg0: i32, %arg1: memref<1xi32, #tpu.memory_space<smem>>, %arg2: memref<8x8xi32, #tpu.memory_space<smem>>, %arg3: memref<8xi32, #tpu.memory_space<smem>>) -> (i32, i32) {
    %c0_i32 = arith.constant 0 : i32
    %c0_i32_0 = arith.constant 0 : i32
    %c0_i32_1 = arith.constant 0 : i32
    return %c0_i32, %c0_i32_0 : i32, i32
  }
  func.func @transform_4(%arg0: i32, %arg1: memref<1xi32, #tpu.memory_space<smem>>, %arg2: memref<8x8xi32, #tpu.memory_space<smem>>, %arg3: memref<8xi32, #tpu.memory_space<smem>>) -> (i32, i32) {
    %c0_i32 = arith.constant 0 : i32
    %c0_i32_0 = arith.constant 0 : i32
    %c0_i32_1 = arith.constant 0 : i32
    return %c0_i32, %c0_i32_0 : i32, i32
  }
  func.func @transform_5(%arg0: i32, %arg1: memref<1xi32, #tpu.memory_space<smem>>, %arg2: memref<8x8xi32, #tpu.memory_space<smem>>, %arg3: memref<8xi32, #tpu.memory_space<smem>>) -> (i32, i32) {
    %c0_i32 = arith.constant 0 : i32
    %c0_i32_0 = arith.constant 0 : i32
    %c0_i32_1 = arith.constant 0 : i32
    return %c0_i32, %c0_i32_0 : i32, i32
  }
  func.func @transform_6(%arg0: i32, %arg1: memref<1xi32, #tpu.memory_space<smem>>, %arg2: memref<8x8xi32, #tpu.memory_space<smem>>, %arg3: memref<8xi32, #tpu.memory_space<smem>>) -> (i32, i32) {
    %c0_i32 = arith.constant 0 : i32
    %c0_i32_0 = arith.constant 0 : i32
    %c0_i32_1 = arith.constant 0 : i32
    return %c0_i32, %c0_i32_0 : i32, i32
  }
  func.func @transform_7(%arg0: i32, %arg1: memref<1xi32, #tpu.memory_space<smem>>, %arg2: memref<8x8xi32, #tpu.memory_space<smem>>, %arg3: memref<8xi32, #tpu.memory_space<smem>>) -> (i32, i32) {
    %c0_i32 = arith.constant 0 : i32
    %c0_i32_0 = arith.constant 0 : i32
    %c0_i32_1 = arith.constant 0 : i32
    return %c0_i32, %c0_i32_0 : i32, i32
  }
  func.func @transform_8(%arg0: i32, %arg1: memref<1xi32, #tpu.memory_space<smem>>, %arg2: memref<8x8xi32, #tpu.memory_space<smem>>, %arg3: memref<8xi32, #tpu.memory_space<smem>>) -> (i32, i32) {
    %c0_i32 = arith.constant 0 : i32
    %c0_i32_0 = arith.constant 0 : i32
    %c0_i32_1 = arith.constant 0 : i32
    return %c0_i32, %c0_i32_0 : i32, i32
  }
  func.func @transform_9(%arg0: i32, %arg1: memref<1xi32, #tpu.memory_space<smem>>, %arg2: memref<8x8xi32, #tpu.memory_space<smem>>, %arg3: memref<8xi32, #tpu.memory_space<smem>>) -> (i32, i32) {
    %c0_i32 = arith.constant 0 : i32
    %c0_i32_0 = arith.constant 0 : i32
    return %arg0, %c0_i32 : i32, i32
  }
}

</mosaic_0001>

<llo_original>
// kernel: tpu_custom_call.1
$region0: #{tpu_custom_call.1}
  #allocation0 [shape = 'u32[]', space=smem, size = 0x4, offset = 0x4, fixed_abs, tag = 'smem constant byte address 0x4 - core index']
  #allocation1 [shape = 'u32[144,128]{1,0:T(1,128)}', space=vmem, size = 0x12000, scoped, tag = 'internal scratch']
  #allocation2 [shape = 'f32[8,128]{1,0:T(8,128)}', space=vmem, size = 0x1000, scoped, tag = 'scratch operand']
  #allocation3 [shape = 's32[1]{0}', space=sflag, size = 0x4, scoped, tag = 'scoped memory for tpu_custom_call.1']
  #allocation4 [shape = 's32[1]{0:T(128)S(6)}', space=smem, size = 0x200, scoped, tag = 'prefetched SMEM operand 0']
  #allocation5 [shape = 'u8[4096]{0}', space=smem, size = 0x1000, scoped, tag = 'prefetched SMEM operand 1']
  #allocation6 [shape = 'u8[512]{0}', space=smem, size = 0x200, scoped, tag = 'prefetched SMEM operand 2']
  %s0 = inlined_call_operand.<no memory space> [shape: s32[1], index: 0, kind: input, shape index: {}]
  %s1 = inlined_call_operand.vmem [shape: s32[8,8], index: 1, kind: input, shape index: {}]
  %s2 = inlined_call_operand.hbm [shape: s32[8], index: 2, kind: input, shape index: {}]
  %s3 = inlined_call_operand.hbm [shape: s32[8,8], index: 3, kind: input, shape index: {}]
  %s4 = inlined_call_operand.vmem [shape: s32[8,1], index: 4, kind: input, shape index: {}]
  %s5 = inlined_call_operand.hbm [shape: f32[64,128], index: 5, kind: input, shape index: {}]
  %s6 = inlined_call_operand.vmem [shape: f32[2,128], index: 6, kind: input, shape index: {}]
  %s7 = inlined_call_operand.vmem [shape: bf16[8,128], index: 7, kind: input, shape index: {}]
  %s8 = inlined_call_operand.hbm [shape: bf16[128,128], index: 8, kind: input, shape index: {}]
  %s9 = inlined_call_operand.vmem [shape: f32[1,128], index: 9, kind: input, shape index: {}]
  %s10 = inlined_call_operand.hbm [shape: bf16[128,128], index: 10, kind: input, shape index: {}]
  %s11 = inlined_call_operand.vmem [shape: f32[1,128], index: 11, kind: input, shape index: {}]
  %s12 = inlined_call_operand.hbm [shape: f32[8,128], index: 12, kind: output, shape index: {}]
  %s13 = sld [smem:[#allocation0]]
  $region69: #{tpu_custom_call.1} parent=0
    _
  %s15 = ssub.s32 1, %s13
  %s16 = scalar_select 0, %s15, %s13
  %17 = sst [smem:[#allocation4]] %s0
  %s18 = sshll.u32 %s1, 4
  %s19 = int_to_ptr.vmem [resolvable:$true] %s18
  %21 = dma.vmem_to_smem %s19, 128, [#allocation5], [#allocation3]
  %23 = dma.hbm_to_smem %s2, 16, [#allocation6], [#allocation3]
  %24 = dma.done [#allocation3], 144
  %25 = sfence
  $region1: #{tpu_custom_call.1} parent=0
    #allocation7 [shape = 'u8[4096]{0}', space=vmem, size = 0x1000, scoped, tag = 'input window, operand 3, single buffered']
    #allocation8 [shape = 's32[1]{0}', space=sflag, size = 0x4, scoped, tag = 'scoped memory for tpu_custom_call.1']
    #allocation9 [shape = 's32[1]{0}', space=sflag, size = 0x4, scoped, tag = 'scoped memory for tpu_custom_call.1']
    #allocation10 [shape = 'u8[32768]{0}', space=vmem, size = 0x8000, scoped, tag = 'input window, operand 5, single buffered']
    #allocation11 [shape = 's32[1]{0}', space=sflag, size = 0x4, scoped, tag = 'scoped memory for tpu_custom_call.1']
    #allocation12 [shape = 'u8[32768]{0}', space=vmem, size = 0x8000, scoped, tag = 'input window, operand 8, single buffered']
    #allocation13 [shape = 'u8[32768]{0}', space=vmem, size = 0x8000, scoped, tag = 'input window, operand 10, single buffered']
    #allocation14 [shape = 's32[1]{0}', space=sflag, size = 0x4, scoped, tag = 'scoped memory for tpu_custom_call.1']
    #allocation15 [shape = 'u8[4096]{0}', space=vmem, size = 0x1000, scoped, tag = 'output window, operand 0, single buffered']
    %26 = vsyncpa [#allocation8], 0
    %27 = vsyncpa [#allocation11], 0
    %28 = vsyncpa [#allocation14], 0
    %29 = vsyncpa [#allocation9], 0
    // Predicated region
    $region2: #{tpu_custom_call.1} parent=1 // pred_check
      _
    $region3: #{tpu_custom_call.1} parent=1 // pred_check_branch
      %31 = sbr.rel (0) target = $region5
    $region4: #{tpu_custom_call.1} parent=1 // pred_region
      %s33 = ssub.s32 128, 128
      %34 = vsyncadd [#allocation8], %s33
      %s36 = sshll.u32 [#allocation7], 4
      %s37 = int_to_ptr.vmem [resolvable:$true] %s36
      %39 = dma.hbm_to_vmem [thread:$0]  %s3, 128, %s37, [#allocation8]
    $region5: #{tpu_custom_call.1} parent=1 // pred_fallthru
      _
    // Predicated region
    $region6: #{tpu_custom_call.1} parent=1 // pred_check
      _
    $region7: #{tpu_custom_call.1} parent=1 // pred_check_branch
      %41 = sbr.rel (0) target = $region9
    $region8: #{tpu_custom_call.1} parent=1 // pred_region
      _
    $region9: #{tpu_custom_call.1} parent=1 // pred_fallthru
      _
    // Predicated region
    $region10: #{tpu_custom_call.1} parent=1 // pred_check
      _
    $region11: #{tpu_custom_call.1} parent=1 // pred_check_branch
      %43 = sbr.rel (0) target = $region13
    $region12: #{tpu_custom_call.1} parent=1 // pred_region
      %s45 = ssub.s32 1024, 1024
      %46 = vsyncadd [#allocation11], %s45
      %s47 = sshll.u32 [#allocation10], 4
      %s48 = int_to_ptr.vmem [resolvable:$true] %s47
      %53 = dma.hbm_to_vmem [thread:$0]  %s5, 1024, %s48, [#allocation11], 128, 128, 8
    $region13: #{tpu_custom_call.1} parent=1 // pred_fallthru
      _
    // Predicated region
    $region14: #{tpu_custom_call.1} parent=1 // pred_check
      _
    $region15: #{tpu_custom_call.1} parent=1 // pred_check_branch
      %55 = sbr.rel (0) target = $region17
    $region16: #{tpu_custom_call.1} parent=1 // pred_region
      _
    $region17: #{tpu_custom_call.1} parent=1 // pred_fallthru
      _
    // Predicated region
    $region18: #{tpu_custom_call.1} parent=1 // pred_check
      _
    $region19: #{tpu_custom_call.1} parent=1 // pred_check_branch
      %57 = sbr.rel (0) target = $region21
    $region20: #{tpu_custom_call.1} parent=1 // pred_region
      _
    $region21: #{tpu_custom_call.1} parent=1 // pred_fallthru
      _
    // Predicated region
    $region22: #{tpu_custom_call.1} parent=1 // pred_check
      _
    $region23: #{tpu_custom_call.1} parent=1 // pred_check_branch
      %59 = sbr.rel (0) target = $region25
    $region24: #{tpu_custom_call.1} parent=1 // pred_region
      %s61 = ssub.s32 1024, 1024
      %62 = vsyncadd [#allocation11], %s61
      %s63 = sshll.u32 [#allocation12], 4
      %s64 = int_to_ptr.vmem [resolvable:$true] %s63
      %69 = dma.hbm_to_vmem [thread:$0]  %s8, 1024, %s64, [#allocation11], 64, 64, 4
    $region25: #{tpu_custom_call.1} parent=1 // pred_fallthru
      _
    // Predicated region
    $region26: #{tpu_custom_call.1} parent=1 // pred_check
      _
    $region27: #{tpu_custom_call.1} parent=1 // pred_check_branch
      %71 = sbr.rel (0) target = $region29
    $region28: #{tpu_custom_call.1} parent=1 // pred_region
      _
    $region29: #{tpu_custom_call.1} parent=1 // pred_fallthru
      _
    // Predicated region
    $region30: #{tpu_custom_call.1} parent=1 // pred_check
      _
    $region31: #{tpu_custom_call.1} parent=1 // pred_check_branch
      %73 = sbr.rel (0) target = $region33
    $region32: #{tpu_custom_call.1} parent=1 // pred_region
      %s75 = ssub.s32 1024, 1024
      %76 = vsyncadd [#allocation14], %s75
      %s77 = sshll.u32 [#allocation13], 4
      %s78 = int_to_ptr.vmem [resolvable:$true] %s77
      %83 = dma.hbm_to_vmem [thread:$0]  %s10, 1024, %s78, [#allocation14], 64, 64, 4
    $region33: #{tpu_custom_call.1} parent=1 // pred_fallthru
      _
    // Predicated region
    $region34: #{tpu_custom_call.1} parent=1 // pred_check
      _
    $region35: #{tpu_custom_call.1} parent=1 // pred_check_branch
      %85 = sbr.rel (0) target = $region37
    $region36: #{tpu_custom_call.1} parent=1 // pred_region
      _
    $region37: #{tpu_custom_call.1} parent=1 // pred_fallthru
      _
    // Predicated region
    $region38: #{tpu_custom_call.1} parent=1 // pred_check
      _
    $region39: #{tpu_custom_call.1} parent=1 // pred_check_branch
      %87 = sbr.rel (0) target = $region41
    $region40: #{tpu_custom_call.1} parent=1 // pred_region
      %88 = dma.done [#allocation8], 128
    $region41: #{tpu_custom_call.1} parent=1 // pred_fallthru
      _
    // Predicated region
    $region42: #{tpu_custom_call.1} parent=1 // pred_check
      _
    $region43: #{tpu_custom_call.1} parent=1 // pred_check_branch
      %90 = sbr.rel (0) target = $region45
    $region44: #{tpu_custom_call.1} parent=1 // pred_region
      %91 = dma.done [#allocation11], 1024
    $region45: #{tpu_custom_call.1} parent=1 // pred_fallthru
      _
    // Predicated region
    $region46: #{tpu_custom_call.1} parent=1 // pred_check
      _
    $region47: #{tpu_custom_call.1} parent=1 // pred_check_branch
      %93 = sbr.rel (0) target = $region49
    $region48: #{tpu_custom_call.1} parent=1 // pred_region
      %94 = dma.done [#allocation11], 1024
    $region49: #{tpu_custom_call.1} parent=1 // pred_fallthru
      _
    // Predicated region
    $region50: #{tpu_custom_call.1} parent=1 // pred_check
      _
    $region51: #{tpu_custom_call.1} parent=1 // pred_check_branch
      %96 = sbr.rel (0) target = $region53
    $region52: #{tpu_custom_call.1} parent=1 // pred_region
      %97 = dma.done [#allocation14], 1024
    $region53: #{tpu_custom_call.1} parent=1 // pred_fallthru
      _
    %s99 = smul.u32 0, 8
    %v100 = vld [vmem:[%s4] sm:$0xff]
    %v101 = vlaneseq
    %v102 = vand.u32 %v101, 127
    %103 = vset.pattern.permute.xlu0 0
    %104 = vperm.xlu0 %103, %v100
    %v105 = vpop.permute.xlu0 %104
    %vm106 = vcmp.lt.s32.totalorder %v102, %v105
    %v107 = vsel %vm106, 1, 0
    %v108 = vcvt.s32.f32 %v107
    %v109 = vcvt.s32.f32 %v100
    %v110 = vmax.f32 %v109, 1.0
    %112 = vset.pattern.permute.xlu0 0
    %113 = vperm.xlu0 %112, %v110
    %v114 = vpop.permute.xlu0 %113
    %v116 = vrcp.pop %v114
    %v117 = vmul.f32 %v108, %v116
    loop: start=0, step=1, limit=8
    $region54: #{tpu_custom_call.1} parent=1 // loop_pre_header
      _
    $region55: #{tpu_custom_call.1} parent=1 // loop_header
      %s119 = sphi 0, %s123
      %p120 = scmp.ge.s32.totalorder %s119, 8
    $region56: #{tpu_custom_call.1} parent=1 // loop_header_branch
      %122 = sbr.rel (%p120) target = $region60
    $region57: #{tpu_custom_call.1} parent=1 // loop_body
      %s124 = sadd.s32 %s99, %s119
      %s125 = sld [smem:[#allocation6 + %s124]]
      %p126 = scmp.gt.s32.totalorder %s125, 1
      %s127 = scalar_select %p126, %s125, 1
      %s128 = scvt.s32.f32 %s127
      %v129 = vstv %s128
      %v130 = vrcp.pop %v129
      %s131 = vtos %v130
      %s132 = smul.u32 %s124, 128
      %s133 = sld [smem:[#allocation5 + %s132]]
      %p134 = scmp.gt.s32.totalorder %s125, 0
      %s135 = scalar_select %p134, %s131, 0.0
      %s136 = scalar_lea.vmem [#allocation10], %s133
      %v137 = vld [vmem:[%s136] sm:$0x1]
      %v138 = vstv %s135
      %v139 = vmul.f32 %v138, %v137
      %v140 = vadd.f32 %v139, 0.0
      %s141 = sadd.s32 %s132, 1
      %s142 = sld [smem:[#allocation5 + %s141]]
      %p143 = scmp.gt.s32.totalorder %s125, 1
      %s144 = scalar_select %p143, %s131, 0.0
      %s145 = scalar_lea.vmem [#allocation10], %s142
      %v146 = vld [vmem:[%s145] sm:$0x1]
      %v147 = vstv %s144
      %v148 = vmul.f32 %v147, %v146
      %v149 = vadd.f32 %v140, %v148
      %s150 = sadd.s32 %s132, 2
      %s151 = sld [smem:[#allocation5 + %s150]]
      %p152 = scmp.gt.s32.totalorder %s125, 2
      %s153 = scalar_select %p152, %s131, 0.0
      %s154 = scalar_lea.vmem [#allocation10], %s151
      %v155 = vld [vmem:[%s154] sm:$0x1]
      %v156 = vstv %s153
      %v157 = vmul.f32 %v156, %v155
      %v158 = vadd.f32 %v149, %v157
      %s159 = sadd.s32 %s132, 3
      %s160 = sld [smem:[#allocation5 + %s159]]
      %p161 = scmp.gt.s32.totalorder %s125, 3
      %s162 = scalar_select %p161, %s131, 0.0
      %s163 = scalar_lea.vmem [#allocation10], %s160
      %v164 = vld [vmem:[%s163] sm:$0x1]
      %v165 = vstv %s162
      %v166 = vmul.f32 %v165, %v164
      %v167 = vadd.f32 %v158, %v166
      %s168 = sadd.s32 %s132, 4
      %s169 = sld [smem:[#allocation5 + %s168]]
      %p170 = scmp.gt.s32.totalorder %s125, 4
      %s171 = scalar_select %p170, %s131, 0.0
      %s172 = scalar_lea.vmem [#allocation10], %s169
      %v173 = vld [vmem:[%s172] sm:$0x1]
      %v174 = vstv %s171
      %v175 = vmul.f32 %v174, %v173
      %v176 = vadd.f32 %v167, %v175
      %s177 = sadd.s32 %s132, 5
      %s178 = sld [smem:[#allocation5 + %s177]]
      %p179 = scmp.gt.s32.totalorder %s125, 5
      %s180 = scalar_select %p179, %s131, 0.0
      %s181 = scalar_lea.vmem [#allocation10], %s178
      %v182 = vld [vmem:[%s181] sm:$0x1]
      %v183 = vstv %s180
      %v184 = vmul.f32 %v183, %v182
      %v185 = vadd.f32 %v176, %v184
      %s186 = sadd.s32 %s132, 6
      %s187 = sld [smem:[#allocation5 + %s186]]
      %p188 = scmp.gt.s32.totalorder %s125, 6
      %s189 = scalar_select %p188, %s131, 0.0
      %s190 = scalar_lea.vmem [#allocation10], %s187
      %v191 = vld [vmem:[%s190] sm:$0x1]
      %v192 = vstv %s189
      %v193 = vmul.f32 %v192, %v191
      %v194 = vadd.f32 %v185, %v193
      %s195 = sadd.s32 %s132, 7
      %s196 = sld [smem:[#allocation5 + %s195]]
      %p197 = scmp.gt.s32.totalorder %s125, 7
      %s198 = scalar_select %p197, %s131, 0.0
      %s199 = scalar_lea.vmem [#allocation10], %s196
      %v200 = vld [vmem:[%s199] sm:$0x1]
      %v201 = vstv %s198
      %v202 = vmul.f32 %v201, %v200
      %v203 = vadd.f32 %v194, %v202
      %s204 = scalar_lea.vmem [#allocation2], %s119
      %205 = vst [vmem:[%s204] sm:$0x1] %v203
    $region58: #{tpu_custom_call.1} parent=1 // loop_footer
      %s123 = sadd.s32 1, %s119
    $region59: #{tpu_custom_call.1} parent=1 // loop_footer_branch
      %118 = sbr.rel target = $region55
    $region60: #{tpu_custom_call.1} parent=1 // loop_exit
      _
    %v206 = vpack.c.bf16 %v117, %v117
    %v207 = vld [vmem:[%s7] sm:$0xf]
    %vm208 = vcmask 64512
    %v210 = vsel %vm208, %v206, 0
    %vm212 = vcmask 1043456
    %v214 = vsel %vm212, %v207, 0
    %216 = vmatprep.subr.bf16.mxu0 0
    %217 = vmatpush1.bf16.msra.mxu0 0
    %218 = vmatprep.subr.bf16.mxu0 0
    %219 = vmatpush1.bf16.msra.mxu0 0
    %220 = vmatprep.subr.bf16.mxu0 0
    %221 = vmatpush1.bf16.msra.mxu0 0
    %222 = vmatprep.subr.bf16.mxu0 0
    %223 = vmatpush1.bf16.msra.mxu0 0
    %224 = vmatprep.subr.bf16.mxu0 0
    %225 = vmatpush1.bf16.msra.mxu0 0
    %226 = vmatprep.subr.bf16.mxu0 0
    %227 = vmatpush1.bf16.msra.mxu0 0
    %228 = vmatprep.subr.bf16.mxu0 0
    %229 = vmatpush1.bf16.msra.mxu0 0
    %230 = vmatprep.subr.bf16.mxu0 0
    %231 = vmatpush1.bf16.msra.mxu0 %v214
    %232 = vmatprep.subr.bf16.mxu0 0
    %233 = vmatpush2.bf16.msra.mxu0 0
    %234 = vmatprep.subr.bf16.mxu0 0
    %235 = vmatpush2.bf16.msra.mxu0 0
    %236 = vmatprep.subr.bf16.mxu0 0
    %237 = vmatpush2.bf16.msra.mxu0 0
    %238 = vmatprep.subr.bf16.mxu0 0
    %239 = vmatpush2.bf16.msra.mxu0 0
    %240 = vmatprep.subr.bf16.mxu0 0
    %241 = vmatpush2.bf16.msra.mxu0 0
    %242 = vmatprep.subr.bf16.mxu0 0
    %243 = vmatpush2.bf16.msra.mxu0 0
    %244 = vmatprep.subr.bf16.mxu0 0
    %245 = vmatpush2.bf16.msra.mxu0 0
    %246 = vmatprep.subr.bf16.mxu0 0
    %247 = vmatpush2.bf16.msra.mxu0 0
    %248 = vmatprep.mubr.bf16.mxu0 0
    %249 = vmatmul.mubr.bf16.gmra.mxu0 %v210
    %v250 = vpop.f32.mrf.mxu0
    %v251 = vadd.f32 0.0, %v250
    %v252 = vpop.f32.mrf.mxu0
    %v253 = vpop.f32.mrf.mxu0
    %v254 = vpop.f32.mrf.mxu0
    %255 = vdwg.mxu0
    %v256 = vld [vmem:[#allocation7] sm:$0xff]
    %vm257 = vcmp.gt.s32.totalorder %v256, 0
    %v258 = vsel %vm257, 1, 0
    %v259 = vcvt.s32.f32 %v258
    %v260 = vmul.f32 %v117, %v259
    %v261 = vsel %vm208, %v260, 0.0
    %262 = vadd.xlane.f32.xlu0 %v261
    %v263 = vpop.xlane.xlu0 %262
    %v264 = vsel %vm208, %v117, 0.0
    %265 = vadd.xlane.f32.xlu0 %v264
    %v266 = vpop.xlane.xlu0 %265
    %v267 = vsub.f32 %v266, %v263
    %v268 = vld [vmem:[%s6] sm:$0x1]
    %v269 = vlaneseq
    %v270 = vshrl.u32 %v269, 7
    %v271 = vsub.s32 0, %v270
    %v272 = vrot.slane %v268, %v271
    %v273 = vmul.f32 %v267, %v272
    %v274 = vld [vmem:[%s6 + $0x1] sm:$0x1]
    %v275 = vlaneseq
    %v276 = vshrl.u32 %v275, 7
    %v277 = vsub.s32 0, %v276
    %v278 = vrot.slane %v274, %v277
    %v279 = vmul.f32 %v263, %v278
    %v280 = vadd.f32 %v273, %v279
    %v281 = vld [vmem:[#allocation2] sm:$0xff]
    %v282 = vadd.f32 %v281, %v251
    %v283 = vadd.f32 %v282, %v280
    %v284 = vpack.c.bf16 %v283, %v283
    %v285 = vld [vmem:[#allocation12] sm:$0xf]
    %v286 = vld [vmem:[#allocation12 + $0x4] sm:$0xf]
    %v287 = vld [vmem:[#allocation12 + $0x8] sm:$0xf]
    %v288 = vld [vmem:[#allocation12 + $0xc] sm:$0xf]
    %v289 = vld [vmem:[#allocation12 + $0x10] sm:$0xf]
    %v290 = vld [vmem:[#allocation12 + $0x14] sm:$0xf]
    %v291 = vld [vmem:[#allocation12 + $0x18] sm:$0xf]
    %v292 = vld [vmem:[#allocation12 + $0x1c] sm:$0xf]
    %v293 = vld [vmem:[#allocation12 + $0x20] sm:$0xf]
    %v294 = vld [vmem:[#allocation12 + $0x24] sm:$0xf]
    %v295 = vld [vmem:[#allocation12 + $0x28] sm:$0xf]
    %v296 = vld [vmem:[#allocation12 + $0x2c] sm:$0xf]
    %v297 = vld [vmem:[#allocation12 + $0x30] sm:$0xf]
    %v298 = vld [vmem:[#allocation12 + $0x34] sm:$0xf]
    %v299 = vld [vmem:[#allocation12 + $0x38] sm:$0xf]
    %v300 = vld [vmem:[#allocation12 + $0x3c] sm:$0xf]
    %v301 = vld [vmem:[%s9] sm:$0x1]
    %v303 = vlaneseq
    %v304 = vshrl.u32 %v303, 7
    %v305 = vsub.s32 0, %v304
    %v306 = vrot.slane %v301, %v305
    %v324 = vunpack.c.l.b16 %v285
    %v325 = vunpack.c.l.b16 %v286
    %v326 = vunpack.c.l.b16 %v287
    %v327 = vunpack.c.l.b16 %v288
    %v328 = vunpack.c.l.b16 %v289
    %v329 = vunpack.c.l.b16 %v290
    %v330 = vunpack.c.l.b16 %v291
    %v331 = vunpack.c.l.b16 %v292
    %v332 = vunpack.c.l.b16 %v293
    %v333 = vunpack.c.l.b16 %v294
    %v334 = vunpack.c.l.b16 %v295
    %v335 = vunpack.c.l.b16 %v296
    %v336 = vunpack.c.l.b16 %v297
    %v337 = vunpack.c.l.b16 %v298
    %v338 = vunpack.c.l.b16 %v299
    %v339 = vunpack.c.l.b16 %v300
    %v340 = vpack.c.b16 %v325, %v324
    %v341 = vpack.c.b16 %v327, %v326
    %v342 = vpack.c.b16 %v329, %v328
    %v343 = vpack.c.b16 %v331, %v330
    %v344 = vpack.c.b16 %v333, %v332
    %v345 = vpack.c.b16 %v335, %v334
    %v346 = vpack.c.b16 %v337, %v336
    %v347 = vpack.c.b16 %v339, %v338
    %356 = vmatprep.subr.bf16.mxu0 0
    %357 = vmatpush1.bf16.msra.mxu0 %v347
    %358 = vmatprep.subr.bf16.mxu0 0
    %359 = vmatpush1.bf16.msra.mxu0 %v346
    %360 = vmatprep.subr.bf16.mxu0 0
    %361 = vmatpush1.bf16.msra.mxu0 %v345
    %362 = vmatprep.subr.bf16.mxu0 0
    %363 = vmatpush1.bf16.msra.mxu0 %v344
    %364 = vmatprep.subr.bf16.mxu0 0
    %365 = vmatpush1.bf16.msra.mxu0 %v343
    %366 = vmatprep.subr.bf16.mxu0 0
    %367 = vmatpush1.bf16.msra.mxu0 %v342
    %368 = vmatprep.subr.bf16.mxu0 0
    %369 = vmatpush1.bf16.msra.mxu0 %v341
    %370 = vmatprep.subr.bf16.mxu0 0
    %371 = vmatpush1.bf16.msra.mxu0 %v340
    %372 = vmatprep.subr.bf16.mxu0 0
    %373 = vmatpush2.bf16.msra.mxu0 0
    %374 = vmatprep.subr.bf16.mxu0 0
    %375 = vmatpush2.bf16.msra.mxu0 0
    %376 = vmatprep.subr.bf16.mxu0 0
    %377 = vmatpush2.bf16.msra.mxu0 0
    %378 = vmatprep.subr.bf16.mxu0 0
    %379 = vmatpush2.bf16.msra.mxu0 0
    %380 = vmatprep.subr.bf16.mxu0 0
    %381 = vmatpush2.bf16.msra.mxu0 0
    %382 = vmatprep.subr.bf16.mxu0 0
    %383 = vmatpush2.bf16.msra.mxu0 0
    %384 = vmatprep.subr.bf16.mxu0 0
    %385 = vmatpush2.bf16.msra.mxu0 0
    %386 = vmatprep.subr.bf16.mxu0 0
    %387 = vmatpush2.bf16.msra.mxu0 0
    %388 = vmatprep.mubr.bf16.mxu0 0
    %389 = vmatmul.mubr.bf16.gmra.mxu0 %v284
    %v390 = vpop.f32.mrf.mxu0
    %v391 = vadd.f32 %v306, %v390
    %v392 = vpop.f32.mrf.mxu0
    %v393 = vpop.f32.mrf.mxu0
    %v394 = vpop.f32.mrf.mxu0
    %395 = vdwg.mxu0
    %v396 = vtanh.pop %v391
    %v397 = vlaneseq
    %v398 = vshrl.u32 %v397, 7
    %v399 = vstv %s99
    %v400 = vadd.s32 %v398, %v399
    %s401 = sld [smem:[#allocation4]]
    %v402 = vmul.u32 %v400, 2654435761
    %v403 = vmul.u32 %v102, 2246822519
    %v404 = vadd.s32 %v402, %v403
    %s405 = smul.u32 %s401, 668265263
    %v406 = vstv %s405
    %v407 = vadd.s32 %v404, %v406
    %v408 = vshrl.u32 %v407, 16
    %v409 = vxor.u32 %v407, %v408
    %v410 = vmul.u32 %v409, 2146121005
    %v411 = vshrl.u32 %v410, 15
    %v412 = vxor.u32 %v410, %v411
    %vm413 = vcmp.ge.u32.totalorder %v412, 2147483648
    %v414 = vmul.f32 %v396, 2.0
    %v415 = vsel %vm413, %v414, 0.0
    %v416 = vpack.c.bf16 %v415, %v415
    %v417 = vld [vmem:[#allocation13] sm:$0xf]
    %v418 = vld [vmem:[#allocation13 + $0x4] sm:$0xf]
    %v419 = vld [vmem:[#allocation13 + $0x8] sm:$0xf]
    %v420 = vld [vmem:[#allocation13 + $0xc] sm:$0xf]
    %v421 = vld [vmem:[#allocation13 + $0x10] sm:$0xf]
    %v422 = vld [vmem:[#allocation13 + $0x14] sm:$0xf]
    %v423 = vld [vmem:[#allocation13 + $0x18] sm:$0xf]
    %v424 = vld [vmem:[#allocation13 + $0x1c] sm:$0xf]
    %v425 = vld [vmem:[#allocation13 + $0x20] sm:$0xf]
    %v426 = vld [vmem:[#allocation13 + $0x24] sm:$0xf]
    %v427 = vld [vmem:[#allocation13 + $0x28] sm:$0xf]
    %v428 = vld [vmem:[#allocation13 + $0x2c] sm:$0xf]
    %v429 = vld [vmem:[#allocation13 + $0x30] sm:$0xf]
    %v430 = vld [vmem:[#allocation13 + $0x34] sm:$0xf]
    %v431 = vld [vmem:[#allocation13 + $0x38] sm:$0xf]
    %v432 = vld [vmem:[#allocation13 + $0x3c] sm:$0xf]
    %v433 = vld [vmem:[%s11] sm:$0x1]
    %v435 = vlaneseq
    %v436 = vshrl.u32 %v435, 7
    %v437 = vsub.s32 0, %v436
    %v438 = vrot.slane %v433, %v437
    %v456 = vunpack.c.l.b16 %v417
    %v457 = vunpack.c.l.b16 %v418
    %v458 = vunpack.c.l.b16 %v419
    %v459 = vunpack.c.l.b16 %v420
    %v460 = vunpack.c.l.b16 %v421
    %v461 = vunpack.c.l.b16 %v422
    %v462 = vunpack.c.l.b16 %v423
    %v463 = vunpack.c.l.b16 %v424
    %v464 = vunpack.c.l.b16 %v425
    %v465 = vunpack.c.l.b16 %v426
    %v466 = vunpack.c.l.b16 %v427
    %v467 = vunpack.c.l.b16 %v428
    %v468 = vunpack.c.l.b16 %v429
    %v469 = vunpack.c.l.b16 %v430
    %v470 = vunpack.c.l.b16 %v431
    %v471 = vunpack.c.l.b16 %v432
    %v472 = vpack.c.b16 %v457, %v456
    %v473 = vpack.c.b16 %v459, %v458
    %v474 = vpack.c.b16 %v461, %v460
    %v475 = vpack.c.b16 %v463, %v462
    %v476 = vpack.c.b16 %v465, %v464
    %v477 = vpack.c.b16 %v467, %v466
    %v478 = vpack.c.b16 %v469, %v468
    %v479 = vpack.c.b16 %v471, %v470
    %488 = vmatprep.subr.bf16.mxu0 0
    %489 = vmatpush1.bf16.msra.mxu0 %v479
    %490 = vmatprep.subr.bf16.mxu0 0
    %491 = vmatpush1.bf16.msra.mxu0 %v478
    %492 = vmatprep.subr.bf16.mxu0 0
    %493 = vmatpush1.bf16.msra.mxu0 %v477
    %494 = vmatprep.subr.bf16.mxu0 0
    %495 = vmatpush1.bf16.msra.mxu0 %v476
    %496 = vmatprep.subr.bf16.mxu0 0
    %497 = vmatpush1.bf16.msra.mxu0 %v475
    %498 = vmatprep.subr.bf16.mxu0 0
    %499 = vmatpush1.bf16.msra.mxu0 %v474
    %500 = vmatprep.subr.bf16.mxu0 0
    %501 = vmatpush1.bf16.msra.mxu0 %v473
    %502 = vmatprep.subr.bf16.mxu0 0
    %503 = vmatpush1.bf16.msra.mxu0 %v472
    %504 = vmatprep.subr.bf16.mxu0 0
    %505 = vmatpush2.bf16.msra.mxu0 0
    %506 = vmatprep.subr.bf16.mxu0 0
    %507 = vmatpush2.bf16.msra.mxu0 0
    %508 = vmatprep.subr.bf16.mxu0 0
    %509 = vmatpush2.bf16.msra.mxu0 0
    %510 = vmatprep.subr.bf16.mxu0 0
    %511 = vmatpush2.bf16.msra.mxu0 0
    %512 = vmatprep.subr.bf16.mxu0 0
    %513 = vmatpush2.bf16.msra.mxu0 0
    %514 = vmatprep.subr.bf16.mxu0 0
    %515 = vmatpush2.bf16.msra.mxu0 0
    %516 = vmatprep.subr.bf16.mxu0 0
    %517 = vmatpush2.bf16.msra.mxu0 0
    %518 = vmatprep.subr.bf16.mxu0 0
    %519 = vmatpush2.bf16.msra.mxu0 0
    %520 = vmatprep.mubr.bf16.mxu0 0
    %521 = vmatmul.mubr.bf16.gmra.mxu0 %v416
    %v522 = vpop.f32.mrf.mxu0
    %v523 = vadd.f32 %v438, %v522
    %v524 = vpop.f32.mrf.mxu0
    %v525 = vpop.f32.mrf.mxu0
    %v526 = vpop.f32.mrf.mxu0
    %527 = vdwg.mxu0
    %528 = vst [vmem:[#allocation15] sm:$0xff] %v523
    // Predicated region
    $region61: #{tpu_custom_call.1} parent=1 // pred_check
      _
    $region62: #{tpu_custom_call.1} parent=1 // pred_check_branch
      %530 = sbr.rel (0) target = $region64
    $region63: #{tpu_custom_call.1} parent=1 // pred_region
      %s532 = ssub.s32 128, 128
      %533 = vsyncadd [#allocation9], %s532
      %s535 = sshll.u32 [#allocation15], 4
      %s536 = int_to_ptr.vmem [resolvable:$true] %s535
      %538 = dma.vmem_to_hbm [thread:$0]  %s536, 128, %s12, [#allocation9]
    $region64: #{tpu_custom_call.1} parent=1 // pred_fallthru
      _
    // Predicated region
    $region65: #{tpu_custom_call.1} parent=1 // pred_check
      _
    $region66: #{tpu_custom_call.1} parent=1 // pred_check_branch
      %540 = sbr.rel (0) target = $region68
    $region67: #{tpu_custom_call.1} parent=1 // pred_region
      %541 = dma.done [#allocation9], 128
    $region68: #{tpu_custom_call.1} parent=1 // pred_fallthru
      _
    %542 = vsyncpa [#allocation8], 1
    %543 = vsyncpa [#allocation11], 1
    %544 = vsyncpa [#allocation14], 1
    %545 = vsyncpa [#allocation9], 1

</llo_original>
